<compile_context>
chip_gen: v5e
topology: v5e:2x2
jax: 0.10.0
libtpu: 0.0.40
codegen_flags: <defaults>
</compile_context>

<pallas_src>
import jax
import jax.numpy as jnp
from jax.experimental import pallas as pl
from jax.experimental.pallas import tpu as pltpu

_LANES = 128
_MAX_ROW_TILE = 512   # ~1 MiB f32 input block at Cin=4; no roofline gain past this,
                      # and double-buffered blocks stay far under v5e's 16 MiB scoped VMEM.
_TARGET_STEPS = 8     # aim for >= ~8 grid steps: both v7x TCs busy + DMA overlap.


def _round_up(a, b):
    return ((a + b - 1) // b) * b


def _sublane_multiple(dtype):
    # Native (8,128) f32 tile; packed dtypes need 16 (bf16/f16) / 32 (int8/fp8) sublanes.
    return 8 * (4 // jnp.dtype(dtype).itemsize)


def _outconv_kernel(x_ref, w_ref, b_ref, o_ref):
    # x_ref: (Cin, st, 128) VMEM   w_ref: (Cout, Cin) SMEM
    # b_ref: (Cout,)        SMEM   o_ref: (Cout, st, 128) VMEM
    cin = x_ref.shape[0]
    cout = o_ref.shape[0]
    # Unrolled broadcast-FMA over the tiny static channel dims: pure VPU work on
    # dense (st, 128) tiles.  Each x plane is loaded exactly once and reused for
    # all output channels; the bias is folded into the accumulator init.
    plane = x_ref[0].astype(jnp.float32)
    accs = [b_ref[co] + w_ref[co, 0] * plane for co in range(cout)]
    for ci in range(1, cin):
        plane = x_ref[ci].astype(jnp.float32)
        accs = [accs[co] + w_ref[co, ci] * plane for co in range(cout)]
    for co in range(cout):
        o_ref[co] = accs[co].astype(o_ref.dtype)


def outconv_pallas(x_ncdhw, weight, bias, *, max_row_tile=_MAX_ROW_TILE):
    """1x1x1 Conv3d forward.

    x_ncdhw : (N, Cin, D, H, W)
    weight  : (Cout, Cin, 1, 1, 1)   -- PyTorch Conv3d weight layout
    bias    : (Cout,)
    returns : (N, Cout, D, H, W), dtype == x dtype
    """
    N, Cin, D, H, W = x_ncdhw.shape
    Cout = weight.shape[0]
    S = D * H * W
    itemsize = jnp.dtype(x_ncdhw.dtype).itemsize

    # Flatten spatial; contiguous reshapes are free.  Only pad if S is not a
    # lane multiple (never the case for power-of-two UNet volumes).
    s_pad = _round_up(S, _LANES)
    x3 = x_ncdhw.reshape(N, Cin, S)
    if s_pad != S:
        # TODO(synk): replace this pad/slice fallback (one extra HBM round trip of x
        # and of the output) with in-kernel manual-DMA handling of the ragged tail.
        x3 = jnp.pad(x3, ((0, 0), (0, 0), (0, s_pad - S)))
    s_rows = s_pad // _LANES
    x4 = x3.reshape(N, Cin, s_rows, _LANES)

    # Spatial row tile: target ~8 total grid steps (v7x dual-TC + pipelining),
    # clamp to the VMEM-friendly cap, and force a legal sublane multiple.
    sub = _sublane_multiple(x_ncdhw.dtype)
    st = pl.cdiv(max(N * s_rows, 1), _TARGET_STEPS)
    st = min(st, max_row_tile)
    st = _round_up(max(st, 1), sub)
    if st >= s_rows:
        st = s_rows          # full-extent block is always legal
    grid = (N, pl.cdiv(s_rows, st))

    w2d = weight.reshape(Cout, Cin).astype(jnp.float32)
    b1d = bias.reshape(Cout).astype(jnp.float32)

    cost = pl.CostEstimate(
        flops=2 * N * S * Cin * Cout,
        transcendentals=0,
        bytes_accessed=N * S * (Cin + Cout) * itemsize + (Cout * Cin + Cout) * 4,
    )

    out4 = pl.pallas_call(
        _outconv_kernel,
        out_shape=jax.ShapeDtypeStruct((N, Cout, s_rows, _LANES), x_ncdhw.dtype),
        grid_spec=pltpu.PrefetchScalarGridSpec(
            num_scalar_prefetch=0,
            grid=grid,
            in_specs=[
                # N squeezed, full Cin, lane-dense (st, 128) spatial tile.
                pl.BlockSpec((None, Cin, st, _LANES), lambda n, s: (n, 0, s, 0)),
                # Tiny weight / bias live whole in SMEM as scalars.
                pl.BlockSpec(memory_space=pltpu.MemorySpace.SMEM),
                pl.BlockSpec(memory_space=pltpu.MemorySpace.SMEM),
            ],
            out_specs=pl.BlockSpec((None, Cout, st, _LANES),
                                   lambda n, s: (n, 0, s, 0)),
        ),
        compiler_params=pltpu.CompilerParams(
            dimension_semantics=("parallel", "parallel")),
        cost_estimate=cost,
    )(x4, w2d, b1d)

    out = out4.reshape(N, Cout, s_pad)
    if s_pad != S:
        out = out[:, :, :S]
    return out.reshape(N, Cout, D, H, W)


if __name__ == "__main__":
    key = jax.random.PRNGKey(0)
    kx, kw, kb = jax.random.split(key, 3)

    # Small shapes consistent with the module: OutConv(inc=4, outc=3)
    N, Cin, Cout, D, H, W = 2, 4, 3, 8, 16, 16

    x = jax.random.normal(kx, (N, Cin, D, H, W), dtype=jnp.float32)

    # Deterministic parameter init (mimics Conv3d uniform init range).
    fan_in = Cin * 1 * 1 * 1
    bound = 1.0 / (fan_in ** 0.5)
    weight = jax.random.uniform(kw, (Cout, Cin, 1, 1, 1),
                                minval=-bound, maxval=bound, dtype=jnp.float32)
    bias = jax.random.uniform(kb, (Cout,),
                              minval=-bound, maxval=bound, dtype=jnp.float32)

    out = jax.block_until_ready(outconv_pallas(x, weight, bias))

    # Reference check against plain-JAX 1x1x1 conv semantics.
    ref = jnp.einsum("ncdhw,oc->nodhw", x, weight.reshape(Cout, Cin)) \
        + bias[None, :, None, None, None]
    assert out.shape == (N, Cout, D, H, W)
    assert jnp.allclose(out, ref, atol=1e-5, rtol=1e-5)

    print("KERNEL_OK")
</pallas_src>

<mosaic_0001>
module attributes {stable_mosaic.version = 11 : i64} {
  func.func @_outconv_kernel(%arg0: i32, %arg1: i32, %arg2: memref<1x4x8x128xf32, #tpu.memory_space<vmem>>, %arg3: memref<3x4xf32, #tpu.memory_space<smem>>, %arg4: memref<3xf32, #tpu.memory_space<smem>>, %arg5: memref<1x3x8x128xf32, #tpu.memory_space<vmem>>) attributes {dimension_semantics = [#tpu.dimension_semantics<parallel>, #tpu.dimension_semantics<parallel>], iteration_bounds = array<i64: 2, 2>, scalar_prefetch = 0 : i64, scratch_operands = 0 : i64, tpu.core_type = #tpu.core_type<tc>, window_params = [{transform_indices = @transform_0, window_bounds = array<i64: 1, 4, 8, 128>}, {transform_indices = @transform_1, window_bounds = array<i64: 3, 4>}, {transform_indices = @transform_2, window_bounds = array<i64: 3>}, {transform_indices = @transform_3, window_bounds = array<i64: 1, 3, 8, 128>}]} {
    %c0 = arith.constant 0 : index
    %c0_0 = arith.constant 0 : index
    %c0_1 = arith.constant 0 : index
    %c0_2 = arith.constant 0 : index
    %0 = vector.load %arg2[%c0, %c0_0, %c0_1, %c0_2] : memref<1x4x8x128xf32, #tpu.memory_space<vmem>>, vector<1x1x8x128xf32>
    %1 = vector.shape_cast %0 : vector<1x1x8x128xf32> to vector<8x128xf32>
    %c0_3 = arith.constant 0 : index
    %2 = memref.load %arg4[%c0_3] : memref<3xf32, #tpu.memory_space<smem>>
    %c0_4 = arith.constant 0 : index
    %c0_5 = arith.constant 0 : index
    %3 = memref.load %arg3[%c0_4, %c0_5] : memref<3x4xf32, #tpu.memory_space<smem>>
    %4 = vector.broadcast %3 : f32 to vector<8x128xf32>
    %5 = arith.mulf %4, %1 : vector<8x128xf32>
    %6 = vector.broadcast %2 : f32 to vector<8x128xf32>
    %7 = arith.addf %6, %5 : vector<8x128xf32>
    %c1 = arith.constant 1 : index
    %8 = memref.load %arg4[%c1] : memref<3xf32, #tpu.memory_space<smem>>
    %c1_6 = arith.constant 1 : index
    %c0_7 = arith.constant 0 : index
    %9 = memref.load %arg3[%c1_6, %c0_7] : memref<3x4xf32, #tpu.memory_space<smem>>
    %10 = vector.broadcast %9 : f32 to vector<8x128xf32>
    %11 = arith.mulf %10, %1 : vector<8x128xf32>
    %12 = vector.broadcast %8 : f32 to vector<8x128xf32>
    %13 = arith.addf %12, %11 : vector<8x128xf32>
    %c2 = arith.constant 2 : index
    %14 = memref.load %arg4[%c2] : memref<3xf32, #tpu.memory_space<smem>>
    %c2_8 = arith.constant 2 : index
    %c0_9 = arith.constant 0 : index
    %15 = memref.load %arg3[%c2_8, %c0_9] : memref<3x4xf32, #tpu.memory_space<smem>>
    %16 = vector.broadcast %15 : f32 to vector<8x128xf32>
    %17 = arith.mulf %16, %1 : vector<8x128xf32>
    %18 = vector.broadcast %14 : f32 to vector<8x128xf32>
    %19 = arith.addf %18, %17 : vector<8x128xf32>
    %c0_10 = arith.constant 0 : index
    %c1_11 = arith.constant 1 : index
    %c0_12 = arith.constant 0 : index
    %c0_13 = arith.constant 0 : index
    %20 = vector.load %arg2[%c0_10, %c1_11, %c0_12, %c0_13] : memref<1x4x8x128xf32, #tpu.memory_space<vmem>>, vector<1x1x8x128xf32>
    %21 = vector.shape_cast %20 : vector<1x1x8x128xf32> to vector<8x128xf32>
    %c0_14 = arith.constant 0 : index
    %c1_15 = arith.constant 1 : index
    %22 = memref.load %arg3[%c0_14, %c1_15] : memref<3x4xf32, #tpu.memory_space<smem>>
    %23 = vector.broadcast %22 : f32 to vector<8x128xf32>
    %24 = arith.mulf %23, %21 : vector<8x128xf32>
    %25 = arith.addf %7, %24 : vector<8x128xf32>
    %c1_16 = arith.constant 1 : index
    %c1_17 = arith.constant 1 : index
    %26 = memref.load %arg3[%c1_16, %c1_17] : memref<3x4xf32, #tpu.memory_space<smem>>
    %27 = vector.broadcast %26 : f32 to vector<8x128xf32>
    %28 = arith.mulf %27, %21 : vector<8x128xf32>
    %29 = arith.addf %13, %28 : vector<8x128xf32>
    %c2_18 = arith.constant 2 : index
    %c1_19 = arith.constant 1 : index
    %30 = memref.load %arg3[%c2_18, %c1_19] : memref<3x4xf32, #tpu.memory_space<smem>>
    %31 = vector.broadcast %30 : f32 to vector<8x128xf32>
    %32 = arith.mulf %31, %21 : vector<8x128xf32>
    %33 = arith.addf %19, %32 : vector<8x128xf32>
    %c0_20 = arith.constant 0 : index
    %c2_21 = arith.constant 2 : index
    %c0_22 = arith.constant 0 : index
    %c0_23 = arith.constant 0 : index
    %34 = vector.load %arg2[%c0_20, %c2_21, %c0_22, %c0_23] : memref<1x4x8x128xf32, #tpu.memory_space<vmem>>, vector<1x1x8x128xf32>
    %35 = vector.shape_cast %34 : vector<1x1x8x128xf32> to vector<8x128xf32>
    %c0_24 = arith.constant 0 : index
    %c2_25 = arith.constant 2 : index
    %36 = memref.load %arg3[%c0_24, %c2_25] : memref<3x4xf32, #tpu.memory_space<smem>>
    %37 = vector.broadcast %36 : f32 to vector<8x128xf32>
    %38 = arith.mulf %37, %35 : vector<8x128xf32>
    %39 = arith.addf %25, %38 : vector<8x128xf32>
    %c1_26 = arith.constant 1 : index
    %c2_27 = arith.constant 2 : index
    %40 = memref.load %arg3[%c1_26, %c2_27] : memref<3x4xf32, #tpu.memory_space<smem>>
    %41 = vector.broadcast %40 : f32 to vector<8x128xf32>
    %42 = arith.mulf %41, %35 : vector<8x128xf32>
    %43 = arith.addf %29, %42 : vector<8x128xf32>
    %c2_28 = arith.constant 2 : index
    %c2_29 = arith.constant 2 : index
    %44 = memref.load %arg3[%c2_28, %c2_29] : memref<3x4xf32, #tpu.memory_space<smem>>
    %45 = vector.broadcast %44 : f32 to vector<8x128xf32>
    %46 = arith.mulf %45, %35 : vector<8x128xf32>
    %47 = arith.addf %33, %46 : vector<8x128xf32>
    %c0_30 = arith.constant 0 : index
    %c3 = arith.constant 3 : index
    %c0_31 = arith.constant 0 : index
    %c0_32 = arith.constant 0 : index
    %48 = vector.load %arg2[%c0_30, %c3, %c0_31, %c0_32] : memref<1x4x8x128xf32, #tpu.memory_space<vmem>>, vector<1x1x8x128xf32>
    %49 = vector.shape_cast %48 : vector<1x1x8x128xf32> to vector<8x128xf32>
    %c0_33 = arith.constant 0 : index
    %c3_34 = arith.constant 3 : index
    %50 = memref.load %arg3[%c0_33, %c3_34] : memref<3x4xf32, #tpu.memory_space<smem>>
    %51 = vector.broadcast %50 : f32 to vector<8x128xf32>
    %52 = arith.mulf %51, %49 : vector<8x128xf32>
    %53 = arith.addf %39, %52 : vector<8x128xf32>
    %c1_35 = arith.constant 1 : index
    %c3_36 = arith.constant 3 : index
    %54 = memref.load %arg3[%c1_35, %c3_36] : memref<3x4xf32, #tpu.memory_space<smem>>
    %55 = vector.broadcast %54 : f32 to vector<8x128xf32>
    %56 = arith.mulf %55, %49 : vector<8x128xf32>
    %57 = arith.addf %43, %56 : vector<8x128xf32>
    %c2_37 = arith.constant 2 : index
    %c3_38 = arith.constant 3 : index
    %58 = memref.load %arg3[%c2_37, %c3_38] : memref<3x4xf32, #tpu.memory_space<smem>>
    %59 = vector.broadcast %58 : f32 to vector<8x128xf32>
    %60 = arith.mulf %59, %49 : vector<8x128xf32>
    %61 = arith.addf %47, %60 : vector<8x128xf32>
    %c0_39 = arith.constant 0 : index
    %c0_40 = arith.constant 0 : index
    %c0_41 = arith.constant 0 : index
    %c0_42 = arith.constant 0 : index
    %62 = vector.load %arg5[%c0_39, %c0_40, %c0_41, %c0_42] : memref<1x3x8x128xf32, #tpu.memory_space<vmem>>, vector<1x1x8x128xf32>
    %63 = vector.shape_cast %62 : vector<1x1x8x128xf32> to vector<8x128xf32>
    %64 = vector.shape_cast %53 : vector<8x128xf32> to vector<1x1x8x128xf32>
    tpu.vector_store %arg5[%c0_39, %c0_40, %c0_41, %c0_42], %64 {strides = array<i32>} : memref<1x3x8x128xf32, #tpu.memory_space<vmem>>, vector<1x1x8x128xf32>,
    %c0_43 = arith.constant 0 : index
    %c1_44 = arith.constant 1 : index
    %c0_45 = arith.constant 0 : index
    %c0_46 = arith.constant 0 : index
    %65 = vector.load %arg5[%c0_43, %c1_44, %c0_45, %c0_46] : memref<1x3x8x128xf32, #tpu.memory_space<vmem>>, vector<1x1x8x128xf32>
    %66 = vector.shape_cast %65 : vector<1x1x8x128xf32> to vector<8x128xf32>
    %67 = vector.shape_cast %57 : vector<8x128xf32> to vector<1x1x8x128xf32>
    tpu.vector_store %arg5[%c0_43, %c1_44, %c0_45, %c0_46], %67 {strides = array<i32>} : memref<1x3x8x128xf32, #tpu.memory_space<vmem>>, vector<1x1x8x128xf32>,
    %c0_47 = arith.constant 0 : index
    %c2_48 = arith.constant 2 : index
    %c0_49 = arith.constant 0 : index
    %c0_50 = arith.constant 0 : index
    %68 = vector.load %arg5[%c0_47, %c2_48, %c0_49, %c0_50] : memref<1x3x8x128xf32, #tpu.memory_space<vmem>>, vector<1x1x8x128xf32>
    %69 = vector.shape_cast %68 : vector<1x1x8x128xf32> to vector<8x128xf32>
    %70 = vector.shape_cast %61 : vector<8x128xf32> to vector<1x1x8x128xf32>
    tpu.vector_store %arg5[%c0_47, %c2_48, %c0_49, %c0_50], %70 {strides = array<i32>} : memref<1x3x8x128xf32, #tpu.memory_space<vmem>>, vector<1x1x8x128xf32>,
    return
  }
  func.func @transform_0(%arg0: i32, %arg1: i32) -> (i32, i32, i32, i32) {
    %c0_i32 = arith.constant 0 : i32
    %c0_i32_0 = arith.constant 0 : i32
    %c0_i32_1 = arith.constant 0 : i32
    return %arg0, %c0_i32, %arg1, %c0_i32_0 : i32, i32, i32, i32
  }
  func.func @transform_1(%arg0: i32, %arg1: i32) -> (i32, i32) {
    %c0_i32 = arith.constant 0 : i32
    %c0_i32_0 = arith.constant 0 : i32
    %c0_i32_1 = arith.constant 0 : i32
    return %c0_i32, %c0_i32_0 : i32, i32
  }
  func.func @transform_2(%arg0: i32, %arg1: i32) -> i32 {
    %c0_i32 = arith.constant 0 : i32
    %c0_i32_0 = arith.constant 0 : i32
    return %c0_i32 : i32
  }
  func.func @transform_3(%arg0: i32, %arg1: i32) -> (i32, i32, i32, i32) {
    %c0_i32 = arith.constant 0 : i32
    %c0_i32_0 = arith.constant 0 : i32
    %c0_i32_1 = arith.constant 0 : i32
    return %arg0, %c0_i32, %arg1, %c0_i32_0 : i32, i32, i32, i32
  }
}

</mosaic_0001>

<llo_original>
// kernel: tpu_custom_call.1
$region0: #{tpu_custom_call.1}
  #allocation0 [shape = 'u32[]', space=smem, size = 0x4, offset = 0x4, fixed_abs, tag = 'smem constant byte address 0x4 - core index']
  #allocation1 [shape = 'u32[72,128]{1,0:T(1,128)}', space=vmem, size = 0x9000, scoped, tag = 'internal scratch']
  %s0 = inlined_call_operand.hbm [shape: f32[2,4,16,128], index: 0, kind: input, shape index: {}]
  %s1 = inlined_call_operand.hbm [shape: f32[3,4], index: 1, kind: input, shape index: {}]
  %s2 = inlined_call_operand.vmem [shape: f32[3], index: 2, kind: input, shape index: {}]
  %s3 = inlined_call_operand.hbm [shape: f32[2,3,16,128], index: 3, kind: output, shape index: {}]
  %s4 = sld [smem:[#allocation0]]
  $region57: #{tpu_custom_call.1} parent=0
    _
  %s6 = ssub.s32 1, %s4
  %s7 = scalar_select 0, %s6, %s4
  $region1: #{tpu_custom_call.1} parent=0
    #allocation2 [shape = 'u8[32768]{0}', space=vmem, size = 0x8000, scoped, tag = 'input window, operand 0']
    #allocation3 [shape = 's32[2]{0}', space=sflag, size = 0x8, scoped, tag = 'scoped memory for tpu_custom_call.1']
    #allocation4 [shape = 's32[2]{0}', space=sflag, size = 0x8, scoped, tag = 'scoped memory for tpu_custom_call.1']
    #allocation5 [shape = 's32[2]{0}', space=sflag, size = 0x8, scoped, tag = 'scoped memory for tpu_custom_call.1']
    #allocation6 [shape = 's32[2]{0}', space=sflag, size = 0x8, scoped, tag = 'scoped memory for tpu_custom_call.1']
    #allocation7 [shape = 'u8[2048]{0}', space=smem, size = 0x800, scoped, tag = 'input window, operand 1, single buffered']
    #allocation8 [shape = 'u8[512]{0}', space=smem, size = 0x200, scoped, tag = 'input window, operand 2, single buffered']
    #allocation9 [shape = 'u8[24576]{0}', space=vmem, size = 0x6000, scoped, tag = 'output window, operand 0']
    %8 = vsyncpa [#allocation3], 0
    %s9 = scalar_lea.sflag [#allocation3], 1
    %10 = vsyncpa %s9, 0
    %11 = vsyncpa [#allocation5], 0
    %12 = vsyncpa [#allocation6], 0
    %13 = vsyncpa [#allocation4], 0
    %s14 = scalar_lea.sflag [#allocation4], 1
    %15 = vsyncpa %s14, 0
    loop: start=0, step=1, limit=6
    $region2: #{tpu_custom_call.1} parent=1 // loop_pre_header
      _
    $region3: #{tpu_custom_call.1} parent=1 // loop_header
      %s17 = sphi 0, %s21
      %p18 = scmp.ge.s32.totalorder %s17, 6
      %s24 = sphi 0, %s36
      %s25 = sphi 0, %s32
      %s26 = sphi 0, %s24
      %s27 = sphi 0, %s25
      %s28 = sphi 0, %s26
      %s29 = sphi 0, %s27
      %s41 = sphi 0, %s43
      %s44 = sphi 0, %s41
      %s45 = sphi 0, %s44
      %s61 = sphi 0, %s45
      %s65 = sphi 0, %s65
      %s67 = sphi 0, %s65
      %s68 = sphi 0, %s67
      %s82 = sphi 0, %s68
      %s86 = sphi 0, %s86
      %s88 = sphi 0, %s86
      %s89 = sphi 0, %s88
      %s103 = sphi 0, %s89
      %s111 = sphi 0, %s113
      %s114 = sphi 0, %s111
      %s115 = sphi 0, %s114
      %s131 = sphi 0, %s115
    $region4: #{tpu_custom_call.1} parent=1 // loop_header_branch
      %20 = sbr.rel (%p18) target = $region8
    $region5: #{tpu_custom_call.1} parent=1 // loop_body
      %s22 = ssub.s32 %s17, 1
      %s23 = ssub.s32 %s17, 2
      %s30 = sadd.s32 1, %s25
      %p31 = scmp.ge.s32.totalorder %s30, 2
      %s32 = scalar_select %p31, 0, %s30
      %s33 = sadd.s32 1, %s24
      %s34 = scalar_select %p31, %s33, %s24
      %p35 = scmp.ge.s32.totalorder %s34, 2
      %s36 = scalar_select %p35, 0, %s34
      %s37 = ssub.s32 %s24, %s36
      %s38 = ssub.s32 %s25, %s32
      %s39 = sor.u32 %s37, %s38
      %p40 = scmp.eq.s32.totalorder %s39, 0
      %s42 = sadd.s32 %s41, 1
      %s43 = scalar_select %p40, %s41, %s42
      %p46 = pneg %p40
      %p47 = scmp.eq.s32.totalorder %s17, 3
      %p48 = por %p46, %p47
      %p49 = scmp.ne.s32.totalorder %s41, %s44
      %p50 = scmp.eq.s32.totalorder %s17, 0
      %p51 = por %p49, %p50
      %p52 = scmp.ne.s32.totalorder %s41, %s44
      %p53 = scmp.eq.s32.totalorder %s22, 3
      %p54 = por %p52, %p53
      %p55 = scmp.ne.s32.totalorder %s44, %s45
      %p56 = scmp.eq.s32.totalorder %s22, 0
      %p57 = por %p55, %p56
      %p58 = scmp.ne.s32.totalorder %s44, %s45
      %p59 = scmp.eq.s32.totalorder %s23, 3
      %p60 = por %p58, %p59
      %p62 = scmp.ne.s32.totalorder %s45, %s61
      %p63 = scmp.eq.s32.totalorder %s23, 0
      %p64 = por %p62, %p63
      %s66 = sadd.s32 %s65, 1
      %p69 = scmp.eq.s32.totalorder %s17, 3
      %p70 = scmp.ne.s32.totalorder %s65, %s67
      %p71 = scmp.eq.s32.totalorder %s17, 0
      %p72 = por %p70, %p71
      %p73 = scmp.ne.s32.totalorder %s65, %s67
      %p74 = scmp.eq.s32.totalorder %s22, 3
      %p75 = por %p73, %p74
      %p76 = scmp.ne.s32.totalorder %s67, %s68
      %p77 = scmp.eq.s32.totalorder %s22, 0
      %p78 = por %p76, %p77
      %p79 = scmp.ne.s32.totalorder %s67, %s68
      %p80 = scmp.eq.s32.totalorder %s23, 3
      %p81 = por %p79, %p80
      %p83 = scmp.ne.s32.totalorder %s68, %s82
      %p84 = scmp.eq.s32.totalorder %s23, 0
      %p85 = por %p83, %p84
      %s87 = sadd.s32 %s86, 1
      %p90 = scmp.eq.s32.totalorder %s17, 3
      %p91 = scmp.ne.s32.totalorder %s86, %s88
      %p92 = scmp.eq.s32.totalorder %s17, 0
      %p93 = por %p91, %p92
      %p94 = scmp.ne.s32.totalorder %s86, %s88
      %p95 = scmp.eq.s32.totalorder %s22, 3
      %p96 = por %p94, %p95
      %p97 = scmp.ne.s32.totalorder %s88, %s89
      %p98 = scmp.eq.s32.totalorder %s22, 0
      %p99 = por %p97, %p98
      %p100 = scmp.ne.s32.totalorder %s88, %s89
      %p101 = scmp.eq.s32.totalorder %s23, 3
      %p102 = por %p100, %p101
      %p104 = scmp.ne.s32.totalorder %s89, %s103
      %p105 = scmp.eq.s32.totalorder %s23, 0
      %p106 = por %p104, %p105
      %s107 = ssub.s32 %s24, %s36
      %s108 = ssub.s32 %s25, %s32
      %s109 = sor.u32 %s107, %s108
      %p110 = scmp.eq.s32.totalorder %s109, 0
      %s112 = sadd.s32 %s111, 1
      %s113 = scalar_select %p110, %s111, %s112
      %p116 = pneg %p110
      %p117 = scmp.eq.s32.totalorder %s17, 3
      %p118 = por %p116, %p117
      %p119 = scmp.ne.s32.totalorder %s111, %s114
      %p120 = scmp.eq.s32.totalorder %s17, 0
      %p121 = por %p119, %p120
      %p122 = scmp.ne.s32.totalorder %s111, %s114
      %p123 = scmp.eq.s32.totalorder %s22, 3
      %p124 = por %p122, %p123
      %p125 = scmp.ne.s32.totalorder %s114, %s115
      %p126 = scmp.eq.s32.totalorder %s22, 0
      %p127 = por %p125, %p126
      %p128 = scmp.ne.s32.totalorder %s114, %s115
      %p129 = scmp.eq.s32.totalorder %s23, 3
      %p130 = por %p128, %p129
      %p132 = scmp.ne.s32.totalorder %s115, %s131
      %p133 = scmp.eq.s32.totalorder %s23, 0
      %p134 = por %p132, %p133
      %p135 = scmp.le.s32.totalorder 1, %s17
      %p136 = scmp.lt.s32.totalorder %s17, 5
      %p137 = pnand %p135, %p136
      %p138 = pneg %p137
      // Predicated region
      $region9: #{tpu_custom_call.1} parent=5 // pred_check
        _
      $region10: #{tpu_custom_call.1} parent=5 // pred_check_branch
        %140 = sbr.rel (%p137) target = $region12
      $region11: #{tpu_custom_call.1} parent=5 // pred_region
        %s141 = ssub.s32 %s17, 1
        // Predicated region
        $region13: #{tpu_custom_call.1} parent=11 // pred_check
          %p142 = pneg %p78
        $region14: #{tpu_custom_call.1} parent=11 // pred_check_branch
          %144 = sbr.rel (%p142) target = $region16
        $region15: #{tpu_custom_call.1} parent=11 // pred_region
          %146 = vsyncadd [#allocation5], 0
          %s148 = sshll.u32 %s1, 4
          %s149 = int_to_ptr.hbm [resolvable:$true] %s148
          %151 = dma.hbm_to_smem %s149, 64, [#allocation7], [#allocation5]
        $region16: #{tpu_custom_call.1} parent=11 // pred_fallthru
          _
        // Predicated region
        $region17: #{tpu_custom_call.1} parent=11 // pred_check
          %p152 = pneg %p99
        $region18: #{tpu_custom_call.1} parent=11 // pred_check_branch
          %154 = sbr.rel (%p152) target = $region20
        $region19: #{tpu_custom_call.1} parent=11 // pred_region
          %156 = vsyncadd [#allocation6], 0
          %s158 = sshll.u32 %s2, 4
          %s159 = int_to_ptr.vmem [resolvable:$true] %s158
          %161 = dma.vmem_to_smem %s159, 16, [#allocation8], [#allocation6]
        $region20: #{tpu_custom_call.1} parent=11 // pred_fallthru
          _
      $region12: #{tpu_custom_call.1} parent=5 // pred_fallthru
        _
      %p162 = scmp.lt.s32.totalorder %s17, 4
      // Predicated region
      $region21: #{tpu_custom_call.1} parent=5 // pred_check
        %p163 = pneg %p162
      $region22: #{tpu_custom_call.1} parent=5 // pred_check_branch
        %165 = sbr.rel (%p163) target = $region24
      $region23: #{tpu_custom_call.1} parent=5 // pred_region
        // Predicated region
        $region25: #{tpu_custom_call.1} parent=23 // pred_check
          %p166 = pneg %p51
        $region26: #{tpu_custom_call.1} parent=23 // pred_check_branch
          %168 = sbr.rel (%p166) target = $region28
        $region27: #{tpu_custom_call.1} parent=23 // pred_region
          %s169 = sand.u32 %s41, 1
          %s170 = scalar_lea.sflag [#allocation3], %s169
          %s171 = sand.u32 %s41, 1
          %s172 = smul.addr %s171, 32
          %s173 = scalar_lea.vmem [#allocation2], %s172
          %175 = vsyncadd %s170, 0
          %s176 = smul.addr %s24, 8
          %s177 = sadd.s32 %s25, %s176
          %s178 = smul.addr %s177, 8
          %s179 = scalar_lea.hbm %s0, %s178
          %s180 = sshll.u32 %s179, 4
          %s181 = int_to_ptr.hbm [resolvable:$true] %s180
          %s182 = sshll.u32 %s173, 4
          %s183 = int_to_ptr.vmem [resolvable:$true] %s182
          %188 = dma.hbm_to_vmem [thread:$0]  %s181, 512, %s183, %s170, 256, 128, 8
        $region28: #{tpu_custom_call.1} parent=23 // pred_fallthru
          _
      $region24: #{tpu_custom_call.1} parent=5 // pred_fallthru
        _
      %p189 = scmp.le.s32.totalorder 1, %s17
      %p190 = scmp.lt.s32.totalorder %s17, 5
      %p191 = pnand %p189, %p190
      %p192 = pneg %p191
      // Predicated region
      $region29: #{tpu_custom_call.1} parent=5 // pred_check
        _
      $region30: #{tpu_custom_call.1} parent=5 // pred_check_branch
        %194 = sbr.rel (%p191) target = $region32
      $region31: #{tpu_custom_call.1} parent=5 // pred_region
        %s195 = ssub.s32 %s17, 1
        %s196 = sand.u32 %s44, 1
        %s197 = scalar_lea.sflag [#allocation3], %s196
        %s198 = sand.u32 %s44, 1
        %s199 = smul.addr %s198, 32
        %s200 = scalar_lea.vmem [#allocation2], %s199
        // Predicated region
        $region33: #{tpu_custom_call.1} parent=31 // pred_check
          %p201 = pneg %p57
        $region34: #{tpu_custom_call.1} parent=31 // pred_check_branch
          %203 = sbr.rel (%p201) target = $region36
        $region35: #{tpu_custom_call.1} parent=31 // pred_region
          %205 = dma.done %s197, 512
        $region36: #{tpu_custom_call.1} parent=31 // pred_fallthru
          _
        // Predicated region
        $region37: #{tpu_custom_call.1} parent=31 // pred_check
          %p206 = pneg %p78
        $region38: #{tpu_custom_call.1} parent=31 // pred_check_branch
          %208 = sbr.rel (%p206) target = $region40
        $region39: #{tpu_custom_call.1} parent=31 // pred_region
          %210 = dma.done [#allocation5], 64
        $region40: #{tpu_custom_call.1} parent=31 // pred_fallthru
          _
        // Predicated region
        $region41: #{tpu_custom_call.1} parent=31 // pred_check
          %p211 = pneg %p99
        $region42: #{tpu_custom_call.1} parent=31 // pred_check_branch
          %213 = sbr.rel (%p211) target = $region44
        $region43: #{tpu_custom_call.1} parent=31 // pred_region
          %215 = dma.done [#allocation6], 16
        $region44: #{tpu_custom_call.1} parent=31 // pred_fallthru
          _
        %216 = sfence
        %s217 = sand.u32 %s44, 1
        %s218 = scalar_lea.sflag [#allocation3], %s217
        %s219 = sand.u32 %s44, 1
        %s220 = smul.addr %s219, 32
        %s221 = scalar_lea.vmem [#allocation2], %s220
        %p222 = pneg %p57
        %p223 = pneg %p54
        %p224 = pneg %p78
        %p225 = pneg %p75
        %p226 = pneg %p99
        %p227 = pneg %p96
        %p228 = pneg %p127
        %p229 = pneg %p124
        %s230 = sand.u32 %s114, 1
        %s231 = scalar_lea.sflag [#allocation4], %s230
        %s232 = sand.u32 %s114, 1
        %s233 = smul.addr %s232, 24
        %s234 = scalar_lea.vmem [#allocation9], %s233
        %v235 = vld [vmem:[%s200] sm:$0xff]
        %s236 = sld [smem:[#allocation8]]
        %s237 = sld [smem:[#allocation7]]
        %v238 = vstv %s237
        %v239 = vmul.f32 %v238, %v235
        %v240 = vstv %s236
        %v241 = vadd.f32 %v240, %v239
        %s242 = sld [smem:[#allocation8 + $0x1]]
        %s243 = sld [smem:[#allocation7 + $0x80]]
        %v244 = vstv %s243
        %v245 = vmul.f32 %v244, %v235
        %v246 = vstv %s242
        %v247 = vadd.f32 %v246, %v245
        %s248 = sld [smem:[#allocation8 + $0x2]]
        %s249 = sld [smem:[#allocation7 + $0x100]]
        %v250 = vstv %s249
        %v251 = vmul.f32 %v250, %v235
        %v252 = vstv %s248
        %v253 = vadd.f32 %v252, %v251
        %s254 = scalar_lea.vmem %s200, 8 [#allocation2]
        %v255 = vld [vmem:[%s254] sm:$0xff]
        %s256 = sld [smem:[#allocation7 + $0x1]]
        %v257 = vstv %s256
        %v258 = vmul.f32 %v257, %v255
        %v259 = vadd.f32 %v241, %v258
        %s260 = sld [smem:[#allocation7 + $0x81]]
        %v261 = vstv %s260
        %v262 = vmul.f32 %v261, %v255
        %v263 = vadd.f32 %v247, %v262
        %s264 = sld [smem:[#allocation7 + $0x101]]
        %v265 = vstv %s264
        %v266 = vmul.f32 %v265, %v255
        %v267 = vadd.f32 %v253, %v266
        %s268 = scalar_lea.vmem %s200, 16 [#allocation2]
        %v269 = vld [vmem:[%s268] sm:$0xff]
        %s270 = sld [smem:[#allocation7 + $0x2]]
        %v271 = vstv %s270
        %v272 = vmul.f32 %v271, %v269
        %v273 = vadd.f32 %v259, %v272
        %s274 = sld [smem:[#allocation7 + $0x82]]
        %v275 = vstv %s274
        %v276 = vmul.f32 %v275, %v269
        %v277 = vadd.f32 %v263, %v276
        %s278 = sld [smem:[#allocation7 + $0x102]]
        %v279 = vstv %s278
        %v280 = vmul.f32 %v279, %v269
        %v281 = vadd.f32 %v267, %v280
        %s282 = scalar_lea.vmem %s200, 24 [#allocation2]
        %v283 = vld [vmem:[%s282] sm:$0xff]
        %s284 = sld [smem:[#allocation7 + $0x3]]
        %v285 = vstv %s284
        %v286 = vmul.f32 %v285, %v283
        %v287 = vadd.f32 %v273, %v286
        %s288 = sld [smem:[#allocation7 + $0x83]]
        %v289 = vstv %s288
        %v290 = vmul.f32 %v289, %v283
        %v291 = vadd.f32 %v277, %v290
        %s292 = sld [smem:[#allocation7 + $0x103]]
        %v293 = vstv %s292
        %v294 = vmul.f32 %v293, %v283
        %v295 = vadd.f32 %v281, %v294
        %296 = vst [vmem:[%s234] sm:$0xff] %v287
        %s297 = scalar_lea.vmem %s234, 8 [#allocation9]
        %298 = vst [vmem:[%s297] sm:$0xff] %v291
        %s299 = scalar_lea.vmem %s234, 16 [#allocation9]
        %300 = vst [vmem:[%s299] sm:$0xff] %v295
        %s301 = sand.u32 %s114, 1
        %s302 = scalar_lea.sflag [#allocation4], %s301
        %s303 = sand.u32 %s114, 1
        %s304 = smul.addr %s303, 24
        %s305 = scalar_lea.vmem [#allocation9], %s304
        // Predicated region
        $region45: #{tpu_custom_call.1} parent=31 // pred_check
          %p306 = pneg %p124
        $region46: #{tpu_custom_call.1} parent=31 // pred_check_branch
          %308 = sbr.rel (%p306) target = $region48
        $region47: #{tpu_custom_call.1} parent=31 // pred_region
          %310 = vsyncadd %s302, 0
          %s311 = smul.addr %s26, 6
          %s312 = sadd.s32 %s27, %s311
          %s313 = smul.addr %s312, 8
          %s314 = scalar_lea.hbm %s3, %s313
          %s315 = sshll.u32 %s305, 4
          %s316 = int_to_ptr.vmem [resolvable:$true] %s315
          %s317 = sshll.u32 %s314, 4
          %s318 = int_to_ptr.hbm [resolvable:$true] %s317
          %323 = dma.vmem_to_hbm [thread:$0]  %s316, 384, %s318, %s302, 128, 256, 8
        $region48: #{tpu_custom_call.1} parent=31 // pred_fallthru
          _
      $region32: #{tpu_custom_call.1} parent=5 // pred_fallthru
        _
      %p324 = scmp.le.s32.totalorder 2, %s17
      // Predicated region
      $region49: #{tpu_custom_call.1} parent=5 // pred_check
        %p325 = pneg %p324
      $region50: #{tpu_custom_call.1} parent=5 // pred_check_branch
        %327 = sbr.rel (%p325) target = $region52
      $region51: #{tpu_custom_call.1} parent=5 // pred_region
        %s328 = ssub.s32 %s17, 2
        // Predicated region
        $region53: #{tpu_custom_call.1} parent=51 // pred_check
          %p329 = pneg %p130
        $region54: #{tpu_custom_call.1} parent=51 // pred_check_branch
          %331 = sbr.rel (%p329) target = $region56
        $region55: #{tpu_custom_call.1} parent=51 // pred_region
          %s332 = sand.u32 %s115, 1
          %s333 = scalar_lea.sflag [#allocation4], %s332
          %s334 = sand.u32 %s115, 1
          %s335 = smul.addr %s334, 24
          %s336 = scalar_lea.vmem [#allocation9], %s335
          %338 = dma.done %s333, 384
        $region56: #{tpu_custom_call.1} parent=51 // pred_fallthru
          _
      $region52: #{tpu_custom_call.1} parent=5 // pred_fallthru
        _
    $region6: #{tpu_custom_call.1} parent=1 // loop_footer
      %s21 = sadd.s32 1, %s17
    $region7: #{tpu_custom_call.1} parent=1 // loop_footer_branch
      %16 = sbr.rel target = $region3
    $region8: #{tpu_custom_call.1} parent=1 // loop_exit
      _
    %339 = vsyncpa [#allocation3], 1
    %s340 = scalar_lea.sflag [#allocation3], 1
    %341 = vsyncpa %s340, 1
    %342 = vsyncpa [#allocation4], 1
    %s343 = scalar_lea.sflag [#allocation4], 1
    %344 = vsyncpa %s343, 1
    %345 = vsyncpa [#allocation5], 1
    %s346 = scalar_lea.sflag [#allocation5], 1
    %347 = vsyncpa %s346, 1
    %348 = vsyncpa [#allocation6], 1
    %s349 = scalar_lea.sflag [#allocation6], 1
    %350 = vsyncpa %s349, 1

</llo_original>
